<compile_context>
chip_gen: v7x
topology: tpu7x:2x2x1
jax: 0.10.0
libtpu: 0.0.40
codegen_flags: <defaults>
</compile_context>

<pallas_src>
import jax
import jax.numpy as jnp
from jax.experimental import pallas as pl
from jax.experimental.pallas import tpu as pltpu


def _round_up(v, m):
    return ((v + m - 1) // m) * m


def mlp_kernel(xT_ref, w1_ref, b1_ref, w2_ref, b2_ref,
               w3_ref, b3_ref, w4_ref, b4_ref, o_ref):
    # All tiles are VMEM-resident; 4 MXU matmuls with f32 accumulation, bias-add
    # and ReLU on the VPU at full lane utilization (batch on the lane axis).
    cdt = w1_ref.dtype  # compute dtype of the matmul operands (bf16 by default)

    h = jnp.dot(w1_ref[...], xT_ref[...], preferred_element_type=jnp.float32)
    h = jnp.maximum(h + b1_ref[...], 0.0).astype(cdt)

    h = jnp.dot(w2_ref[...], h, preferred_element_type=jnp.float32)
    h = jnp.maximum(h + b2_ref[...], 0.0).astype(cdt)

    h = jnp.dot(w3_ref[...], h, preferred_element_type=jnp.float32)
    h = jnp.maximum(h + b3_ref[...], 0.0).astype(cdt)

    out = jnp.dot(w4_ref[...], h, preferred_element_type=jnp.float32)
    # [1, batch_tile] f32 -> lane-dense, unmasked store.
    o_ref[...] = (out + b4_ref[...]).astype(o_ref.dtype)


def mlp_forward(x, params, *, batch_tile=512, compute_dtype=jnp.bfloat16):
    """4-layer MLP forward.  x: [B, input_size] float32.  Returns [B, 1] float32."""
    (w1, b1), (w2, b2), (w3, b3), (w4, b4) = params
    B, D_in = x.shape
    D_out = w4.shape[0]  # = 1

    # Keep the tile a multiple of 128 (lane-dense) and no bigger than needed;
    # pad the batch so the grid divides evenly (no tiny-tile fallback path).
    batch_tile = _round_up(batch_tile, 128)
    batch_tile = max(128, min(batch_tile, _round_up(B, 128)))
    B_pad = _round_up(B, batch_tile)
    grid = (B_pad // batch_tile,)

    # Batch-on-lanes: transpose once in the wrapper (free layout plumbing) and
    # cast the streamed operand to bf16 to halve HBM traffic.
    xT = jnp.transpose(x).astype(compute_dtype)
    if B_pad != B:
        xT = jnp.pad(xT, ((0, 0), (0, B_pad - B)))

    cast_w = lambda w: w.astype(compute_dtype)
    # Weights/biases are tiny (~10 KB total) and pinned to block (0, 0), so they
    # are DMA'd once; default double-buffering overhead is negligible here.
    full = lambda arr: pl.BlockSpec(arr.shape, lambda i: (0, 0))

    out_T = pl.pallas_call(
        mlp_kernel,
        out_shape=jax.ShapeDtypeStruct((D_out, B_pad), jnp.float32),
        grid_spec=pltpu.PrefetchScalarGridSpec(
            num_scalar_prefetch=0,
            grid=grid,
            in_specs=[
                pl.BlockSpec((D_in, batch_tile), lambda i: (0, i)),
                full(w1), full(b1),
                full(w2), full(b2),
                full(w3), full(b3),
                full(w4), full(b4),
            ],
            out_specs=pl.BlockSpec((D_out, batch_tile), lambda i: (0, i)),
        ),
        compiler_params=pltpu.CompilerParams(
            dimension_semantics=("parallel",)),  # batch axis sharded across v7x TCs
    )(xT, cast_w(w1), b1, cast_w(w2), b2, cast_w(w3), b3, cast_w(w4), b4)

    # Back to the PyTorch [B, 1] convention; drop the padded rows.
    return jnp.transpose(out_T)[:B]


def init_params(key, input_size, h1, h2, h3):
    """PyTorch-style init: W [out, in], b [out, 1], U(-1/sqrt(fan_in), +)."""
    sizes = [(input_size, h1), (h1, h2), (h2, h3), (h3, 1)]
    params = []
    for fan_in, fan_out in sizes:
        key, kw, kb = jax.random.split(key, 3)
        bound = 1.0 / (fan_in ** 0.5)
        w = jax.random.uniform(kw, (fan_out, fan_in), jnp.float32, -bound, bound)
        b = jax.random.uniform(kb, (fan_out, 1), jnp.float32, -bound, bound)
        params.append((w, b))
    return params


def mlp_reference(x, params, compute_dtype=jnp.bfloat16):
    """Pure-JAX reference mirroring the kernel's dtype flow (bf16 in, f32 acc)."""
    (w1, b1), (w2, b2), (w3, b3), (w4, b4) = params
    h = x.astype(compute_dtype)
    for (w, b) in ((w1, b1), (w2, b2), (w3, b3)):
        y = jnp.dot(h, w.T.astype(compute_dtype),
                    preferred_element_type=jnp.float32) + b.T
        h = jnp.maximum(y, 0.0).astype(compute_dtype)
    return jnp.dot(h, w4.T.astype(compute_dtype),
                   preferred_element_type=jnp.float32) + b4.T


if __name__ == "__main__":
    key = jax.random.PRNGKey(0)
    k_x, k_p = jax.random.split(key)

    # Small deterministic example; batch deliberately NOT a multiple of the tile
    # to exercise the padding path, and >= 2 grid steps for megacore sharding.
    batch = 300
    input_size, h1, h2, h3 = 16, 32, 32, 32

    x = jax.random.normal(k_x, (batch, input_size), jnp.float32)
    params = init_params(k_p, input_size, h1, h2, h3)

    out = mlp_forward(x, params, batch_tile=128)  # 300 -> padded to 384, grid=(3,)
    out = jax.block_until_ready(out)

    ref = mlp_reference(x, params)
    assert out.shape == (batch, 1)
    assert jnp.allclose(out, ref, atol=1e-2, rtol=1e-2), "mismatch vs reference"

    print("KERNEL_OK")
</pallas_src>

<mosaic_0001>
module attributes {stable_mosaic.version = 11 : i64} {
  func.func @mlp_kernel(%arg0: i32, %arg1: memref<16x128xbf16, #tpu.memory_space<vmem>>, %arg2: memref<32x16xbf16, #tpu.memory_space<vmem>>, %arg3: memref<32x1xf32, #tpu.memory_space<vmem>>, %arg4: memref<32x32xbf16, #tpu.memory_space<vmem>>, %arg5: memref<32x1xf32, #tpu.memory_space<vmem>>, %arg6: memref<32x32xbf16, #tpu.memory_space<vmem>>, %arg7: memref<32x1xf32, #tpu.memory_space<vmem>>, %arg8: memref<1x32xbf16, #tpu.memory_space<vmem>>, %arg9: memref<1x1xf32, #tpu.memory_space<vmem>>, %arg10: memref<1x128xf32, #tpu.memory_space<vmem>>) attributes {dimension_semantics = [#tpu.dimension_semantics<parallel>], iteration_bounds = array<i64: 3>, scalar_prefetch = 0 : i64, scratch_operands = 0 : i64, tpu.core_type = #tpu.core_type<tc>, window_params = [{transform_indices = @transform_0, window_bounds = array<i64: 16, 128>}, {pipeline_mode = #tpu.pipeline_mode<synchronous>, transform_indices = @transform_1, window_bounds = array<i64: 32, 16>}, {pipeline_mode = #tpu.pipeline_mode<synchronous>, transform_indices = @transform_2, window_bounds = array<i64: 32, 1>}, {pipeline_mode = #tpu.pipeline_mode<synchronous>, transform_indices = @transform_3, window_bounds = array<i64: 32, 32>}, {pipeline_mode = #tpu.pipeline_mode<synchronous>, transform_indices = @transform_4, window_bounds = array<i64: 32, 1>}, {pipeline_mode = #tpu.pipeline_mode<synchronous>, transform_indices = @transform_5, window_bounds = array<i64: 32, 32>}, {pipeline_mode = #tpu.pipeline_mode<synchronous>, transform_indices = @transform_6, window_bounds = array<i64: 32, 1>}, {pipeline_mode = #tpu.pipeline_mode<synchronous>, transform_indices = @transform_7, window_bounds = array<i64: 1, 32>}, {pipeline_mode = #tpu.pipeline_mode<synchronous>, transform_indices = @transform_8, window_bounds = array<i64: 1, 1>}, {transform_indices = @transform_9, window_bounds = array<i64: 1, 128>}]} {
    %c0 = arith.constant 0 : index
    %c0_0 = arith.constant 0 : index
    %0 = vector.load %arg2[%c0, %c0_0] : memref<32x16xbf16, #tpu.memory_space<vmem>>, vector<32x16xbf16>
    %c0_1 = arith.constant 0 : index
    %c0_2 = arith.constant 0 : index
    %1 = vector.load %arg1[%c0_1, %c0_2] : memref<16x128xbf16, #tpu.memory_space<vmem>>, vector<16x128xbf16>
    %cst = arith.constant dense<0.000000e+00> : vector<32x128xf32>
    %2 = tpu.matmul %0, %1, %cst {dimension_numbers = #tpu.dot_dimension_numbers<[1], [0], [0], [1], [0, 0, 1, 1], [], []>} : vector<32x16xbf16>, vector<16x128xbf16>, vector<32x128xf32> -> vector<32x128xf32>
    %c0_3 = arith.constant 0 : index
    %c0_4 = arith.constant 0 : index
    %3 = vector.load %arg3[%c0_3, %c0_4] : memref<32x1xf32, #tpu.memory_space<vmem>>, vector<32x1xf32>
    %4 = vector.broadcast %3 : vector<32x1xf32> to vector<32x128xf32>
    %5 = arith.addf %2, %4 : vector<32x128xf32>
    %cst_5 = arith.constant 0.000000e+00 : f32
    %6 = vector.broadcast %cst_5 : f32 to vector<32x128xf32>
    %7 = arith.maximumf %5, %6 : vector<32x128xf32>
    %8 = arith.truncf %7 : vector<32x128xf32> to vector<32x128xbf16>
    %c0_6 = arith.constant 0 : index
    %c0_7 = arith.constant 0 : index
    %9 = vector.load %arg4[%c0_6, %c0_7] : memref<32x32xbf16, #tpu.memory_space<vmem>>, vector<32x32xbf16>
    %cst_8 = arith.constant dense<0.000000e+00> : vector<32x128xf32>
    %10 = tpu.matmul %9, %8, %cst_8 {dimension_numbers = #tpu.dot_dimension_numbers<[1], [0], [0], [1], [0, 0, 1, 1], [], []>} : vector<32x32xbf16>, vector<32x128xbf16>, vector<32x128xf32> -> vector<32x128xf32>
    %c0_9 = arith.constant 0 : index
    %c0_10 = arith.constant 0 : index
    %11 = vector.load %arg5[%c0_9, %c0_10] : memref<32x1xf32, #tpu.memory_space<vmem>>, vector<32x1xf32>
    %12 = vector.broadcast %11 : vector<32x1xf32> to vector<32x128xf32>
    %13 = arith.addf %10, %12 : vector<32x128xf32>
    %cst_11 = arith.constant 0.000000e+00 : f32
    %14 = vector.broadcast %cst_11 : f32 to vector<32x128xf32>
    %15 = arith.maximumf %13, %14 : vector<32x128xf32>
    %16 = arith.truncf %15 : vector<32x128xf32> to vector<32x128xbf16>
    %c0_12 = arith.constant 0 : index
    %c0_13 = arith.constant 0 : index
    %17 = vector.load %arg6[%c0_12, %c0_13] : memref<32x32xbf16, #tpu.memory_space<vmem>>, vector<32x32xbf16>
    %cst_14 = arith.constant dense<0.000000e+00> : vector<32x128xf32>
    %18 = tpu.matmul %17, %16, %cst_14 {dimension_numbers = #tpu.dot_dimension_numbers<[1], [0], [0], [1], [0, 0, 1, 1], [], []>} : vector<32x32xbf16>, vector<32x128xbf16>, vector<32x128xf32> -> vector<32x128xf32>
    %c0_15 = arith.constant 0 : index
    %c0_16 = arith.constant 0 : index
    %19 = vector.load %arg7[%c0_15, %c0_16] : memref<32x1xf32, #tpu.memory_space<vmem>>, vector<32x1xf32>
    %20 = vector.broadcast %19 : vector<32x1xf32> to vector<32x128xf32>
    %21 = arith.addf %18, %20 : vector<32x128xf32>
    %cst_17 = arith.constant 0.000000e+00 : f32
    %22 = vector.broadcast %cst_17 : f32 to vector<32x128xf32>
    %23 = arith.maximumf %21, %22 : vector<32x128xf32>
    %24 = arith.truncf %23 : vector<32x128xf32> to vector<32x128xbf16>
    %c0_18 = arith.constant 0 : index
    %c0_19 = arith.constant 0 : index
    %25 = vector.load %arg8[%c0_18, %c0_19] : memref<1x32xbf16, #tpu.memory_space<vmem>>, vector<1x32xbf16>
    %cst_20 = arith.constant dense<0.000000e+00> : vector<1x128xf32>
    %26 = tpu.matmul %25, %24, %cst_20 {dimension_numbers = #tpu.dot_dimension_numbers<[1], [0], [0], [1], [0, 0, 1, 1], [], []>} : vector<1x32xbf16>, vector<32x128xbf16>, vector<1x128xf32> -> vector<1x128xf32>
    %c0_21 = arith.constant 0 : index
    %c0_22 = arith.constant 0 : index
    %27 = vector.load %arg9[%c0_21, %c0_22] : memref<1x1xf32, #tpu.memory_space<vmem>>, vector<1x1xf32>
    %28 = vector.broadcast %27 : vector<1x1xf32> to vector<1x128xf32>
    %29 = arith.addf %26, %28 : vector<1x128xf32>
    %c0_23 = arith.constant 0 : index
    %c0_24 = arith.constant 0 : index
    %30 = vector.load %arg10[%c0_23, %c0_24] : memref<1x128xf32, #tpu.memory_space<vmem>>, vector<1x128xf32>
    tpu.vector_store %arg10[%c0_23, %c0_24], %29 {strides = array<i32>} : memref<1x128xf32, #tpu.memory_space<vmem>>, vector<1x128xf32>,
    return
  }
  func.func @transform_0(%arg0: i32) -> (i32, i32) {
    %c0_i32 = arith.constant 0 : i32
    %c0_i32_0 = arith.constant 0 : i32
    return %c0_i32, %arg0 : i32, i32
  }
  func.func @transform_1(%arg0: i32) -> (i32, i32) {
    %c0_i32 = arith.constant 0 : i32
    %c0_i32_0 = arith.constant 0 : i32
    %c0_i32_1 = arith.constant 0 : i32
    return %c0_i32, %c0_i32_0 : i32, i32
  }
  func.func @transform_2(%arg0: i32) -> (i32, i32) {
    %c0_i32 = arith.constant 0 : i32
    %c0_i32_0 = arith.constant 0 : i32
    %c0_i32_1 = arith.constant 0 : i32
    return %c0_i32, %c0_i32_0 : i32, i32
  }
  func.func @transform_3(%arg0: i32) -> (i32, i32) {
    %c0_i32 = arith.constant 0 : i32
    %c0_i32_0 = arith.constant 0 : i32
    %c0_i32_1 = arith.constant 0 : i32
    return %c0_i32, %c0_i32_0 : i32, i32
  }
  func.func @transform_4(%arg0: i32) -> (i32, i32) {
    %c0_i32 = arith.constant 0 : i32
    %c0_i32_0 = arith.constant 0 : i32
    %c0_i32_1 = arith.constant 0 : i32
    return %c0_i32, %c0_i32_0 : i32, i32
  }
  func.func @transform_5(%arg0: i32) -> (i32, i32) {
    %c0_i32 = arith.constant 0 : i32
    %c0_i32_0 = arith.constant 0 : i32
    %c0_i32_1 = arith.constant 0 : i32
    return %c0_i32, %c0_i32_0 : i32, i32
  }
  func.func @transform_6(%arg0: i32) -> (i32, i32) {
    %c0_i32 = arith.constant 0 : i32
    %c0_i32_0 = arith.constant 0 : i32
    %c0_i32_1 = arith.constant 0 : i32
    return %c0_i32, %c0_i32_0 : i32, i32
  }
  func.func @transform_7(%arg0: i32) -> (i32, i32) {
    %c0_i32 = arith.constant 0 : i32
    %c0_i32_0 = arith.constant 0 : i32
    %c0_i32_1 = arith.constant 0 : i32
    return %c0_i32, %c0_i32_0 : i32, i32
  }
  func.func @transform_8(%arg0: i32) -> (i32, i32) {
    %c0_i32 = arith.constant 0 : i32
    %c0_i32_0 = arith.constant 0 : i32
    %c0_i32_1 = arith.constant 0 : i32
    return %c0_i32, %c0_i32_0 : i32, i32
  }
  func.func @transform_9(%arg0: i32) -> (i32, i32) {
    %c0_i32 = arith.constant 0 : i32
    %c0_i32_0 = arith.constant 0 : i32
    return %c0_i32, %arg0 : i32, i32
  }
}

</mosaic_0001>

<llo_original>
// kernel: tpu_custom_call.1
$region0: #{tpu_custom_call.1}
  #allocation0 [shape = 'u32[]', space=smem, size = 0x4, offset = 0x4, fixed_abs, tag = 'smem constant byte address 0x4 - core index']
  #allocation1 [shape = 'u32[144,128]{1,0:T(1,128)}', space=vmem, size = 0x12000, scoped, tag = 'internal scratch']
  #allocation2 [shape = 'f32[1,1]{1,0:T(1,128)S(1)}', space=vmem, size = 0x200, scoped, tag = 'scoped memory for tpu_custom_call.1']
  %s0 = inlined_call_operand.vmem [shape: bf16[16,384], index: 0, kind: input, shape index: {}]
  %s1 = inlined_call_operand.vmem [shape: bf16[32,16], index: 1, kind: input, shape index: {}]
  %s2 = inlined_call_operand.vmem [shape: f32[32,1], index: 2, kind: input, shape index: {}]
  %s3 = inlined_call_operand.vmem [shape: bf16[32,32], index: 3, kind: input, shape index: {}]
  %s4 = inlined_call_operand.vmem [shape: f32[32,1], index: 4, kind: input, shape index: {}]
  %s5 = inlined_call_operand.vmem [shape: bf16[32,32], index: 5, kind: input, shape index: {}]
  %s6 = inlined_call_operand.vmem [shape: f32[32,1], index: 6, kind: input, shape index: {}]
  %s7 = inlined_call_operand.vmem [shape: bf16[1,32], index: 7, kind: input, shape index: {}]
  %s8 = inlined_call_operand.<no memory space> [shape: f32[1,1], index: 8, kind: input, shape index: {}]
  %s9 = inlined_call_operand.hbm [shape: f32[1,384], index: 9, kind: output, shape index: {}]
  %s10 = sld [smem:[#allocation0]]
  $region110: #{tpu_custom_call.1} parent=0
    _
  %s12 = ssub.s32 1, %s10
  %s13 = scalar_select 0, %s12, %s10
  %v14 = vstv %s8
  %15 = vst [vmem:[#allocation2] sm:$0x1] %v14
  $region1: #{tpu_custom_call.1} parent=0
    #allocation3 [shape = 'u8[8192]{0}', space=vmem, size = 0x2000, scoped, tag = 'input window, operand 0']
    #allocation4 [shape = 'u8[1024]{0}', space=vmem, size = 0x400, scoped, tag = 'output window, operand 0']
    #allocation5 [shape = 's32[2]{0}', space=sflag, size = 0x8, scoped, tag = 'scoped memory for tpu_custom_call.1']
    %16 = vsyncpa [#allocation5], 0
    %s17 = scalar_lea.sflag [#allocation5], 1
    %18 = vsyncpa %s17, 0
    loop: start=0, step=1, limit=5
    $region2: #{tpu_custom_call.1} parent=1 // loop_pre_header
      _
    $region3: #{tpu_custom_call.1} parent=1 // loop_header
      %s20 = sphi 0, %s24
      %p21 = scmp.ge.s32.totalorder %s20, 5
      %s30 = sphi 0, %s32
      %s33 = sphi 0, %s30
      %s34 = sphi 0, %s33
      %s50 = sphi 0, %s34
      %s54 = sphi 0, %s54
      %s56 = sphi 0, %s54
      %s57 = sphi 0, %s56
      %s71 = sphi 0, %s57
      %s75 = sphi 0, %s75
      %s77 = sphi 0, %s75
      %s78 = sphi 0, %s77
      %s92 = sphi 0, %s78
      %s96 = sphi 0, %s96
      %s98 = sphi 0, %s96
      %s99 = sphi 0, %s98
      %s113 = sphi 0, %s99
      %s117 = sphi 0, %s117
      %s119 = sphi 0, %s117
      %s120 = sphi 0, %s119
      %s134 = sphi 0, %s120
      %s138 = sphi 0, %s138
      %s140 = sphi 0, %s138
      %s141 = sphi 0, %s140
      %s155 = sphi 0, %s141
      %s159 = sphi 0, %s159
      %s161 = sphi 0, %s159
      %s162 = sphi 0, %s161
      %s176 = sphi 0, %s162
      %s180 = sphi 0, %s180
      %s182 = sphi 0, %s180
      %s183 = sphi 0, %s182
      %s197 = sphi 0, %s183
      %s201 = sphi 0, %s201
      %s203 = sphi 0, %s201
      %s204 = sphi 0, %s203
      %s218 = sphi 0, %s204
      %s224 = sphi 0, %s226
      %s227 = sphi 0, %s224
      %s228 = sphi 0, %s227
      %s244 = sphi 0, %s228
    $region4: #{tpu_custom_call.1} parent=1 // loop_header_branch
      %23 = sbr.rel (%p21) target = $region8
    $region5: #{tpu_custom_call.1} parent=1 // loop_body
      %s25 = ssub.s32 %s20, 1
      %s26 = ssub.s32 %s20, 2
      %s27 = sadd.s32 %s20, 1
      %s28 = ssub.s32 %s20, %s27
      %p29 = scmp.eq.s32.totalorder %s28, 0
      %s31 = sadd.s32 %s30, 1
      %s32 = scalar_select %p29, %s30, %s31
      %p35 = pneg %p29
      %p36 = scmp.eq.s32.totalorder %s20, 2
      %p37 = por %p35, %p36
      %p38 = scmp.ne.s32.totalorder %s30, %s33
      %p39 = scmp.eq.s32.totalorder %s20, 0
      %p40 = por %p38, %p39
      %p41 = scmp.ne.s32.totalorder %s30, %s33
      %p42 = scmp.eq.s32.totalorder %s25, 2
      %p43 = por %p41, %p42
      %p44 = scmp.ne.s32.totalorder %s33, %s34
      %p45 = scmp.eq.s32.totalorder %s25, 0
      %p46 = por %p44, %p45
      %p47 = scmp.ne.s32.totalorder %s33, %s34
      %p48 = scmp.eq.s32.totalorder %s26, 2
      %p49 = por %p47, %p48
      %p51 = scmp.ne.s32.totalorder %s34, %s50
      %p52 = scmp.eq.s32.totalorder %s26, 0
      %p53 = por %p51, %p52
      %s55 = sadd.s32 %s54, 1
      %p58 = scmp.eq.s32.totalorder %s20, 2
      %p59 = scmp.ne.s32.totalorder %s54, %s56
      %p60 = scmp.eq.s32.totalorder %s20, 0
      %p61 = por %p59, %p60
      %p62 = scmp.ne.s32.totalorder %s54, %s56
      %p63 = scmp.eq.s32.totalorder %s25, 2
      %p64 = por %p62, %p63
      %p65 = scmp.ne.s32.totalorder %s56, %s57
      %p66 = scmp.eq.s32.totalorder %s25, 0
      %p67 = por %p65, %p66
      %p68 = scmp.ne.s32.totalorder %s56, %s57
      %p69 = scmp.eq.s32.totalorder %s26, 2
      %p70 = por %p68, %p69
      %p72 = scmp.ne.s32.totalorder %s57, %s71
      %p73 = scmp.eq.s32.totalorder %s26, 0
      %p74 = por %p72, %p73
      %s76 = sadd.s32 %s75, 1
      %p79 = scmp.eq.s32.totalorder %s20, 2
      %p80 = scmp.ne.s32.totalorder %s75, %s77
      %p81 = scmp.eq.s32.totalorder %s20, 0
      %p82 = por %p80, %p81
      %p83 = scmp.ne.s32.totalorder %s75, %s77
      %p84 = scmp.eq.s32.totalorder %s25, 2
      %p85 = por %p83, %p84
      %p86 = scmp.ne.s32.totalorder %s77, %s78
      %p87 = scmp.eq.s32.totalorder %s25, 0
      %p88 = por %p86, %p87
      %p89 = scmp.ne.s32.totalorder %s77, %s78
      %p90 = scmp.eq.s32.totalorder %s26, 2
      %p91 = por %p89, %p90
      %p93 = scmp.ne.s32.totalorder %s78, %s92
      %p94 = scmp.eq.s32.totalorder %s26, 0
      %p95 = por %p93, %p94
      %s97 = sadd.s32 %s96, 1
      %p100 = scmp.eq.s32.totalorder %s20, 2
      %p101 = scmp.ne.s32.totalorder %s96, %s98
      %p102 = scmp.eq.s32.totalorder %s20, 0
      %p103 = por %p101, %p102
      %p104 = scmp.ne.s32.totalorder %s96, %s98
      %p105 = scmp.eq.s32.totalorder %s25, 2
      %p106 = por %p104, %p105
      %p107 = scmp.ne.s32.totalorder %s98, %s99
      %p108 = scmp.eq.s32.totalorder %s25, 0
      %p109 = por %p107, %p108
      %p110 = scmp.ne.s32.totalorder %s98, %s99
      %p111 = scmp.eq.s32.totalorder %s26, 2
      %p112 = por %p110, %p111
      %p114 = scmp.ne.s32.totalorder %s99, %s113
      %p115 = scmp.eq.s32.totalorder %s26, 0
      %p116 = por %p114, %p115
      %s118 = sadd.s32 %s117, 1
      %p121 = scmp.eq.s32.totalorder %s20, 2
      %p122 = scmp.ne.s32.totalorder %s117, %s119
      %p123 = scmp.eq.s32.totalorder %s20, 0
      %p124 = por %p122, %p123
      %p125 = scmp.ne.s32.totalorder %s117, %s119
      %p126 = scmp.eq.s32.totalorder %s25, 2
      %p127 = por %p125, %p126
      %p128 = scmp.ne.s32.totalorder %s119, %s120
      %p129 = scmp.eq.s32.totalorder %s25, 0
      %p130 = por %p128, %p129
      %p131 = scmp.ne.s32.totalorder %s119, %s120
      %p132 = scmp.eq.s32.totalorder %s26, 2
      %p133 = por %p131, %p132
      %p135 = scmp.ne.s32.totalorder %s120, %s134
      %p136 = scmp.eq.s32.totalorder %s26, 0
      %p137 = por %p135, %p136
      %s139 = sadd.s32 %s138, 1
      %p142 = scmp.eq.s32.totalorder %s20, 2
      %p143 = scmp.ne.s32.totalorder %s138, %s140
      %p144 = scmp.eq.s32.totalorder %s20, 0
      %p145 = por %p143, %p144
      %p146 = scmp.ne.s32.totalorder %s138, %s140
      %p147 = scmp.eq.s32.totalorder %s25, 2
      %p148 = por %p146, %p147
      %p149 = scmp.ne.s32.totalorder %s140, %s141
      %p150 = scmp.eq.s32.totalorder %s25, 0
      %p151 = por %p149, %p150
      %p152 = scmp.ne.s32.totalorder %s140, %s141
      %p153 = scmp.eq.s32.totalorder %s26, 2
      %p154 = por %p152, %p153
      %p156 = scmp.ne.s32.totalorder %s141, %s155
      %p157 = scmp.eq.s32.totalorder %s26, 0
      %p158 = por %p156, %p157
      %s160 = sadd.s32 %s159, 1
      %p163 = scmp.eq.s32.totalorder %s20, 2
      %p164 = scmp.ne.s32.totalorder %s159, %s161
      %p165 = scmp.eq.s32.totalorder %s20, 0
      %p166 = por %p164, %p165
      %p167 = scmp.ne.s32.totalorder %s159, %s161
      %p168 = scmp.eq.s32.totalorder %s25, 2
      %p169 = por %p167, %p168
      %p170 = scmp.ne.s32.totalorder %s161, %s162
      %p171 = scmp.eq.s32.totalorder %s25, 0
      %p172 = por %p170, %p171
      %p173 = scmp.ne.s32.totalorder %s161, %s162
      %p174 = scmp.eq.s32.totalorder %s26, 2
      %p175 = por %p173, %p174
      %p177 = scmp.ne.s32.totalorder %s162, %s176
      %p178 = scmp.eq.s32.totalorder %s26, 0
      %p179 = por %p177, %p178
      %s181 = sadd.s32 %s180, 1
      %p184 = scmp.eq.s32.totalorder %s20, 2
      %p185 = scmp.ne.s32.totalorder %s180, %s182
      %p186 = scmp.eq.s32.totalorder %s20, 0
      %p187 = por %p185, %p186
      %p188 = scmp.ne.s32.totalorder %s180, %s182
      %p189 = scmp.eq.s32.totalorder %s25, 2
      %p190 = por %p188, %p189
      %p191 = scmp.ne.s32.totalorder %s182, %s183
      %p192 = scmp.eq.s32.totalorder %s25, 0
      %p193 = por %p191, %p192
      %p194 = scmp.ne.s32.totalorder %s182, %s183
      %p195 = scmp.eq.s32.totalorder %s26, 2
      %p196 = por %p194, %p195
      %p198 = scmp.ne.s32.totalorder %s183, %s197
      %p199 = scmp.eq.s32.totalorder %s26, 0
      %p200 = por %p198, %p199
      %s202 = sadd.s32 %s201, 1
      %p205 = scmp.eq.s32.totalorder %s20, 2
      %p206 = scmp.ne.s32.totalorder %s201, %s203
      %p207 = scmp.eq.s32.totalorder %s20, 0
      %p208 = por %p206, %p207
      %p209 = scmp.ne.s32.totalorder %s201, %s203
      %p210 = scmp.eq.s32.totalorder %s25, 2
      %p211 = por %p209, %p210
      %p212 = scmp.ne.s32.totalorder %s203, %s204
      %p213 = scmp.eq.s32.totalorder %s25, 0
      %p214 = por %p212, %p213
      %p215 = scmp.ne.s32.totalorder %s203, %s204
      %p216 = scmp.eq.s32.totalorder %s26, 2
      %p217 = por %p215, %p216
      %p219 = scmp.ne.s32.totalorder %s204, %s218
      %p220 = scmp.eq.s32.totalorder %s26, 0
      %p221 = por %p219, %p220
      %s222 = ssub.s32 %s20, %s27
      %p223 = scmp.eq.s32.totalorder %s222, 0
      %s225 = sadd.s32 %s224, 1
      %s226 = scalar_select %p223, %s224, %s225
      %p229 = pneg %p223
      %p230 = scmp.eq.s32.totalorder %s20, 2
      %p231 = por %p229, %p230
      %p232 = scmp.ne.s32.totalorder %s224, %s227
      %p233 = scmp.eq.s32.totalorder %s20, 0
      %p234 = por %p232, %p233
      %p235 = scmp.ne.s32.totalorder %s224, %s227
      %p236 = scmp.eq.s32.totalorder %s25, 2
      %p237 = por %p235, %p236
      %p238 = scmp.ne.s32.totalorder %s227, %s228
      %p239 = scmp.eq.s32.totalorder %s25, 0
      %p240 = por %p238, %p239
      %p241 = scmp.ne.s32.totalorder %s227, %s228
      %p242 = scmp.eq.s32.totalorder %s26, 2
      %p243 = por %p241, %p242
      %p245 = scmp.ne.s32.totalorder %s228, %s244
      %p246 = scmp.eq.s32.totalorder %s26, 0
      %p247 = por %p245, %p246
      %p248 = scmp.le.s32.totalorder 1, %s20
      %p249 = scmp.lt.s32.totalorder %s20, 4
      %p250 = pnand %p248, %p249
      %p251 = pneg %p250
      // Predicated region
      $region9: #{tpu_custom_call.1} parent=5 // pred_check
        _
      $region10: #{tpu_custom_call.1} parent=5 // pred_check_branch
        %253 = sbr.rel (%p250) target = $region12
      $region11: #{tpu_custom_call.1} parent=5 // pred_region
        %s254 = ssub.s32 %s20, 1
        // Predicated region
        $region13: #{tpu_custom_call.1} parent=11 // pred_check
          %p255 = pneg %p67
        $region14: #{tpu_custom_call.1} parent=11 // pred_check_branch
          %257 = sbr.rel (%p255) target = $region16
        $region15: #{tpu_custom_call.1} parent=11 // pred_region
          _
        $region16: #{tpu_custom_call.1} parent=11 // pred_fallthru
          _
        // Predicated region
        $region17: #{tpu_custom_call.1} parent=11 // pred_check
          %p258 = pneg %p88
        $region18: #{tpu_custom_call.1} parent=11 // pred_check_branch
          %260 = sbr.rel (%p258) target = $region20
        $region19: #{tpu_custom_call.1} parent=11 // pred_region
          _
        $region20: #{tpu_custom_call.1} parent=11 // pred_fallthru
          _
        // Predicated region
        $region21: #{tpu_custom_call.1} parent=11 // pred_check
          %p261 = pneg %p109
        $region22: #{tpu_custom_call.1} parent=11 // pred_check_branch
          %263 = sbr.rel (%p261) target = $region24
        $region23: #{tpu_custom_call.1} parent=11 // pred_region
          _
        $region24: #{tpu_custom_call.1} parent=11 // pred_fallthru
          _
        // Predicated region
        $region25: #{tpu_custom_call.1} parent=11 // pred_check
          %p264 = pneg %p130
        $region26: #{tpu_custom_call.1} parent=11 // pred_check_branch
          %266 = sbr.rel (%p264) target = $region28
        $region27: #{tpu_custom_call.1} parent=11 // pred_region
          _
        $region28: #{tpu_custom_call.1} parent=11 // pred_fallthru
          _
        // Predicated region
        $region29: #{tpu_custom_call.1} parent=11 // pred_check
          %p267 = pneg %p151
        $region30: #{tpu_custom_call.1} parent=11 // pred_check_branch
          %269 = sbr.rel (%p267) target = $region32
        $region31: #{tpu_custom_call.1} parent=11 // pred_region
          _
        $region32: #{tpu_custom_call.1} parent=11 // pred_fallthru
          _
        // Predicated region
        $region33: #{tpu_custom_call.1} parent=11 // pred_check
          %p270 = pneg %p172
        $region34: #{tpu_custom_call.1} parent=11 // pred_check_branch
          %272 = sbr.rel (%p270) target = $region36
        $region35: #{tpu_custom_call.1} parent=11 // pred_region
          _
        $region36: #{tpu_custom_call.1} parent=11 // pred_fallthru
          _
        // Predicated region
        $region37: #{tpu_custom_call.1} parent=11 // pred_check
          %p273 = pneg %p193
        $region38: #{tpu_custom_call.1} parent=11 // pred_check_branch
          %275 = sbr.rel (%p273) target = $region40
        $region39: #{tpu_custom_call.1} parent=11 // pred_region
          _
        $region40: #{tpu_custom_call.1} parent=11 // pred_fallthru
          _
        // Predicated region
        $region41: #{tpu_custom_call.1} parent=11 // pred_check
          %p276 = pneg %p214
        $region42: #{tpu_custom_call.1} parent=11 // pred_check_branch
          %278 = sbr.rel (%p276) target = $region44
        $region43: #{tpu_custom_call.1} parent=11 // pred_region
          _
        $region44: #{tpu_custom_call.1} parent=11 // pred_fallthru
          _
      $region12: #{tpu_custom_call.1} parent=5 // pred_fallthru
        _
      %p279 = scmp.lt.s32.totalorder %s20, 3
      // Predicated region
      $region45: #{tpu_custom_call.1} parent=5 // pred_check
        %p280 = pneg %p279
      $region46: #{tpu_custom_call.1} parent=5 // pred_check_branch
        %282 = sbr.rel (%p280) target = $region48
      $region47: #{tpu_custom_call.1} parent=5 // pred_region
        // Predicated region
        $region49: #{tpu_custom_call.1} parent=47 // pred_check
          %p283 = pneg %p40
        $region50: #{tpu_custom_call.1} parent=47 // pred_check_branch
          %285 = sbr.rel (%p283) target = $region52
        $region51: #{tpu_custom_call.1} parent=47 // pred_region
          %s286 = sand.u32 %s30, 1
          %s287 = sand.u32 %s30, 1
          %s288 = smul.addr %s287, 8
          %s289 = scalar_lea.vmem [#allocation3], %s288
          %s290 = smul.addr %s20, 4
          %s291 = scalar_lea.vmem %s0, %s290
          // Predicated region
          $region53: #{tpu_custom_call.1} parent=51 // pred_check
            _
          $region54: #{tpu_custom_call.1} parent=51 // pred_check_branch
            %293 = sbr.rel (0) target = $region56
          $region55: #{tpu_custom_call.1} parent=51 // pred_region
            // Predicated region
            $region57: #{tpu_custom_call.1} parent=55 // pred_check
              _
            $region58: #{tpu_custom_call.1} parent=55 // pred_check_branch
              %295 = sbr.rel target = $region60
            $region59: #{tpu_custom_call.1} parent=55 // pred_region
              // Predicated region
              $region72: #{tpu_custom_call.1} parent=59 // pred_check
                _
              $region73: #{tpu_custom_call.1} parent=59 // pred_check_branch
                %312 = sbr.rel (0) target = $region75
              $region74: #{tpu_custom_call.1} parent=59 // pred_region
                loop: start=0, step=1, limit=1
                $region76: #{tpu_custom_call.1} parent=74 // loop_pre_header
                  _
                $region77: #{tpu_custom_call.1} parent=74 // loop_header
                  %s314 = sphi 0, %s318
                  %p315 = scmp.ge.s32.totalorder %s314, 1
                  %s319 = sphi %s291, %s291
                  %s320 = sphi %s289, %s289
                $region78: #{tpu_custom_call.1} parent=74 // loop_header_branch
                  %317 = sbr.rel (%p315) target = $region82
                $region79: #{tpu_custom_call.1} parent=74 // loop_body
                  _
                $region80: #{tpu_custom_call.1} parent=74 // loop_footer
                  %s318 = sadd.s32 1, %s314
                $region81: #{tpu_custom_call.1} parent=74 // loop_footer_branch
                  %313 = sbr.rel target = $region77
                $region82: #{tpu_custom_call.1} parent=74 // loop_exit
                  _
                loop: start=0, step=1, limit=1
                $region83: #{tpu_custom_call.1} parent=74 // loop_pre_header
                  _
                $region84: #{tpu_custom_call.1} parent=74 // loop_header
                  %s323 = sphi 0, %s327
                  %p324 = scmp.ge.s32.totalorder %s323, 1
                  %s328 = sphi %s291, %s291
                  %s329 = sphi %s289, %s289
                $region85: #{tpu_custom_call.1} parent=74 // loop_header_branch
                  %326 = sbr.rel (%p324) target = $region89
                $region86: #{tpu_custom_call.1} parent=74 // loop_body
                  %v330 = vld [vmem:[%s328] sm:$0xf]
                  %331 = vst [vmem:[%s329] sm:$0xf] %v330
                  %v332 = vld [vmem:[%s328 + $0xc] sm:$0xf]
                  %333 = vst [vmem:[%s329 + $0x4] sm:$0xf] %v332
                $region87: #{tpu_custom_call.1} parent=74 // loop_footer
                  %s327 = sadd.s32 1, %s323
                $region88: #{tpu_custom_call.1} parent=74 // loop_footer_branch
                  %322 = sbr.rel target = $region84
                $region89: #{tpu_custom_call.1} parent=74 // loop_exit
                  _
              $region75: #{tpu_custom_call.1} parent=59 // pred_fallthru
                _
            $region60: #{tpu_custom_call.1} parent=55 // pred_fallthru
              _
            // Predicated region
            $region61: #{tpu_custom_call.1} parent=55 // pred_check
              _
            $region62: #{tpu_custom_call.1} parent=55 // pred_check_branch
              %297 = sbr.rel (0) target = $region64
            $region63: #{tpu_custom_call.1} parent=55 // pred_region
              loop: start=0, step=1, limit=1
              $region65: #{tpu_custom_call.1} parent=63 // loop_pre_header
                _
              $region66: #{tpu_custom_call.1} parent=63 // loop_header
                %s300 = sphi 0, %s304
                %p301 = scmp.ge.s32.totalorder %s300, 1
                %s305 = sphi %s291, %s291
                %s306 = sphi %s289, %s289
              $region67: #{tpu_custom_call.1} parent=63 // loop_header_branch
                %303 = sbr.rel (%p301) target = $region71
              $region68: #{tpu_custom_call.1} parent=63 // loop_body
                %v307 = vld [vmem:[%s305] sm:$0xf]
                %308 = vst [vmem:[%s306] sm:$0xf] %v307
                %v309 = vld [vmem:[%s305 + $0xc] sm:$0xf]
                %310 = vst [vmem:[%s306 + $0x4] sm:$0xf] %v309
              $region69: #{tpu_custom_call.1} parent=63 // loop_footer
                %s304 = sadd.s32 1, %s300
              $region70: #{tpu_custom_call.1} parent=63 // loop_footer_branch
                %299 = sbr.rel target = $region66
              $region71: #{tpu_custom_call.1} parent=63 // loop_exit
                _
            $region64: #{tpu_custom_call.1} parent=55 // pred_fallthru
              _
          $region56: #{tpu_custom_call.1} parent=51 // pred_fallthru
            _
          %334 = vnop
        $region52: #{tpu_custom_call.1} parent=47 // pred_fallthru
          _
      $region48: #{tpu_custom_call.1} parent=5 // pred_fallthru
        _
      %p335 = scmp.le.s32.totalorder 1, %s20
      %p336 = scmp.lt.s32.totalorder %s20, 4
      %p337 = pnand %p335, %p336
      %p338 = pneg %p337
      // Predicated region
      $region90: #{tpu_custom_call.1} parent=5 // pred_check
        _
      $region91: #{tpu_custom_call.1} parent=5 // pred_check_branch
        %340 = sbr.rel (%p337) target = $region93
      $region92: #{tpu_custom_call.1} parent=5 // pred_region
        %s341 = ssub.s32 %s20, 1
        %s342 = sand.u32 %s33, 1
        %s343 = sand.u32 %s33, 1
        %s344 = smul.addr %s343, 8
        %s345 = scalar_lea.vmem [#allocation3], %s344
        // Predicated region
        $region94: #{tpu_custom_call.1} parent=92 // pred_check
          %p346 = pneg %p46
        $region95: #{tpu_custom_call.1} parent=92 // pred_check_branch
          %348 = sbr.rel (%p346) target = $region97
        $region96: #{tpu_custom_call.1} parent=92 // pred_region
          _
        $region97: #{tpu_custom_call.1} parent=92 // pred_fallthru
          _
        %s349 = sand.u32 %s33, 1
        %s350 = sand.u32 %s33, 1
        %s351 = smul.addr %s350, 8
        %s352 = scalar_lea.vmem [#allocation3], %s351
        %p353 = pneg %p46
        %p354 = pneg %p43
        %p355 = pneg %p67
        %p356 = pneg %p64
        %p357 = pneg %p88
        %p358 = pneg %p85
        %p359 = pneg %p109
        %p360 = pneg %p106
        %p361 = pneg %p130
        %p362 = pneg %p127
        %p363 = pneg %p151
        %p364 = pneg %p148
        %p365 = pneg %p172
        %p366 = pneg %p169
        %p367 = pneg %p193
        %p368 = pneg %p190
        %p369 = pneg %p214
        %p370 = pneg %p211
        %p371 = pneg %p240
        %p372 = pneg %p237
        %s373 = sand.u32 %s227, 1
        %s374 = scalar_lea.sflag [#allocation5], %s373
        %s375 = sand.u32 %s227, 1
        %s376 = scalar_lea.vmem [#allocation4], %s375
        %v378 = vld [vmem:[%s1] sm:$0xf]
        %v379 = vld [vmem:[%s1 + $0x4] sm:$0xf]
        %v380 = vld [vmem:[%s1 + $0x8] sm:$0xf]
        %v381 = vld [vmem:[%s1 + $0xc] sm:$0xf]
        %v382 = vld [vmem:[%s345] sm:$0xf]
        %v383 = vld [vmem:[%s345 + $0x4] sm:$0xf]
        %v384 = vld [vmem:[%s2] sm:$0xff]
        %v385 = vld [vmem:[%s2 + $0x8] sm:$0xff]
        %v386 = vld [vmem:[%s2 + $0x10] sm:$0xff]
        %v387 = vld [vmem:[%s2 + $0x18] sm:$0xff]
        %389 = vset.pattern.permute.xlu0 0
        %390 = vperm.xlu0 %389, %v384
        %v391 = vpop.permute.xlu0 %390
        %394 = vset.pattern.permute.xlu0 0
        %395 = vperm.xlu0 %394, %v385
        %v396 = vpop.permute.xlu0 %395
        %399 = vset.pattern.permute.xlu0 0
        %400 = vperm.xlu0 %399, %v386
        %v401 = vpop.permute.xlu0 %400
        %404 = vset.pattern.permute.xlu0 0
        %405 = vperm.xlu0 %404, %v387
        %v406 = vpop.permute.xlu0 %405
        %v412 = vunpack.c.l.b16 %v378
        %v413 = vunpack.c.l.b16 %v379
        %v414 = vunpack.c.l.b16 %v380
        %v415 = vunpack.c.l.b16 %v381
        %v416 = vpack.c.b16 %v413, %v412
        %v417 = vpack.c.b16 %v415, %v414
        %v420 = vunpack.c.l.b16 %v382
        %v421 = vunpack.c.l.b16 %v383
        %v422 = vpack.c.b16 %v421, %v420
        %vm424 = vcmask 130048
        %v426 = vsel %vm424, %v416, 0
        %v429 = vsel %vm424, %v417, 0
        %431 = vmatprep.subr.bf16.mxu0 0
        %432 = vmatpush1.bf16.msra.mxu0 %v422
        %433 = vmatprep.subr.bf16.mxu0 0
        %434 = vmatpush1.bf16.msra.mxu0 0
        %435 = vmatprep.subr.bf16.mxu0 0
        %436 = vmatpush1.bf16.msra.mxu0 0
        %437 = vmatprep.subr.bf16.mxu0 0
        %438 = vmatpush1.bf16.msra.mxu0 0
        %439 = vmatprep.subr.bf16.mxu0 0
        %440 = vmatpush1.bf16.msra.mxu0 0
        %441 = vmatprep.subr.bf16.mxu0 0
        %442 = vmatpush1.bf16.msra.mxu0 0
        %443 = vmatprep.subr.bf16.mxu0 0
        %444 = vmatpush1.bf16.msra.mxu0 0
        %445 = vmatprep.subr.bf16.mxu0 0
        %446 = vmatpush1.bf16.msra.mxu0 0
        %447 = vmatprep.subr.bf16.mxu0 0
        %448 = vmatpush1.bf16.msra.mxu0 0
        %449 = vmatprep.subr.bf16.mxu0 0
        %450 = vmatpush1.bf16.msra.mxu0 0
        %451 = vmatprep.subr.bf16.mxu0 0
        %452 = vmatpush1.bf16.msra.mxu0 0
        %453 = vmatprep.subr.bf16.mxu0 0
        %454 = vmatpush1.bf16.msra.mxu0 0
        %455 = vmatprep.subr.bf16.mxu0 0
        %456 = vmatpush1.bf16.msra.mxu0 0
        %457 = vmatprep.subr.bf16.mxu0 0
        %458 = vmatpush1.bf16.msra.mxu0 0
        %459 = vmatprep.subr.bf16.mxu0 0
        %460 = vmatpush1.bf16.msra.mxu0 0
        %461 = vmatprep.subr.bf16.mxu0 0
        %462 = vmatpush1.bf16.msra.mxu0 0
        %463 = vmatprep.mubr.bf16.mxu0 0
        %464 = vmatmul.mubr.bf16.gmra.mrb[0].mxu0 %v426
        %v465 = vpop.f32.mrb[0].mxu0
        %v466 = vadd.f32 %v391, %v465
        %v467 = vpop.f32.mrb[0].mxu0
        %v468 = vpop.f32.mrb[0].mxu0
        %v469 = vadd.f32 %v396, %v468
        %v470 = vpop.f32.mrb[0].mxu0
        %471 = vmatprep.mubr.bf16.mxu0 0
        %472 = vmatmul.mubr.bf16.gmra.mrb[0].mxu0 %v429
        %v473 = vpop.f32.mrb[0].mxu0
        %v474 = vadd.f32 %v401, %v473
        %v475 = vpop.f32.mrb[0].mxu0
        %v476 = vpop.f32.mrb[0].mxu0
        %v477 = vadd.f32 %v406, %v476
        %v478 = vpop.f32.mrb[0].mxu0
        %479 = vdwg.mxu0
        %v480 = vmax.f32 %v466, 0.0
        %v481 = vmax.f32 %v469, 0.0
        %v482 = vmax.f32 %v474, 0.0
        %v483 = vmax.f32 %v477, 0.0
        %v484 = vpack.c.bf16 %v481, %v480
        %v485 = vpack.c.bf16 %v483, %v482
        %v486 = vld [vmem:[%s3] sm:$0xf]
        %v487 = vld [vmem:[%s3 + $0x4] sm:$0xf]
        %v488 = vld [vmem:[%s3 + $0x8] sm:$0xf]
        %v489 = vld [vmem:[%s3 + $0xc] sm:$0xf]
        %v490 = vld [vmem:[%s4] sm:$0xff]
        %v491 = vld [vmem:[%s4 + $0x8] sm:$0xff]
        %v492 = vld [vmem:[%s4 + $0x10] sm:$0xff]
        %v493 = vld [vmem:[%s4 + $0x18] sm:$0xff]
        %495 = vset.pattern.permute.xlu0 0
        %496 = vperm.xlu0 %495, %v490
        %v497 = vpop.permute.xlu0 %496
        %500 = vset.pattern.permute.xlu0 0
        %501 = vperm.xlu0 %500, %v491
        %v502 = vpop.permute.xlu0 %501
        %505 = vset.pattern.permute.xlu0 0
        %506 = vperm.xlu0 %505, %v492
        %v507 = vpop.permute.xlu0 %506
        %510 = vset.pattern.permute.xlu0 0
        %511 = vperm.xlu0 %510, %v493
        %v512 = vpop.permute.xlu0 %511
        %v518 = vunpack.c.l.b16 %v486
        %v519 = vunpack.c.l.b16 %v487
        %v520 = vunpack.c.l.b16 %v488
        %v521 = vunpack.c.l.b16 %v489
        %v522 = vpack.c.b16 %v519, %v518
        %v523 = vpack.c.b16 %v521, %v520
        %vm524 = vcmask 261120
        %v526 = vsel %vm524, %v522, 0
        %v529 = vsel %vm524, %v523, 0
        %531 = vmatprep.subr.bf16.mxu0 0
        %532 = vmatpush1.bf16.msra.mxu0 %v484
        %533 = vmatprep.subr.bf16.mxu0 0
        %534 = vmatpush1.bf16.msra.mxu0 %v485
        %535 = vmatprep.subr.bf16.mxu0 0
        %536 = vmatpush1.bf16.msra.mxu0 0
        %537 = vmatprep.subr.bf16.mxu0 0
        %538 = vmatpush1.bf16.msra.mxu0 0
        %539 = vmatprep.subr.bf16.mxu0 0
        %540 = vmatpush1.bf16.msra.mxu0 0
        %541 = vmatprep.subr.bf16.mxu0 0
        %542 = vmatpush1.bf16.msra.mxu0 0
        %543 = vmatprep.subr.bf16.mxu0 0
        %544 = vmatpush1.bf16.msra.mxu0 0
        %545 = vmatprep.subr.bf16.mxu0 0
        %546 = vmatpush1.bf16.msra.mxu0 0
        %547 = vmatprep.subr.bf16.mxu0 0
        %548 = vmatpush1.bf16.msra.mxu0 0
        %549 = vmatprep.subr.bf16.mxu0 0
        %550 = vmatpush1.bf16.msra.mxu0 0
        %551 = vmatprep.subr.bf16.mxu0 0
        %552 = vmatpush1.bf16.msra.mxu0 0
        %553 = vmatprep.subr.bf16.mxu0 0
        %554 = vmatpush1.bf16.msra.mxu0 0
        %555 = vmatprep.subr.bf16.mxu0 0
        %556 = vmatpush1.bf16.msra.mxu0 0
        %557 = vmatprep.subr.bf16.mxu0 0
        %558 = vmatpush1.bf16.msra.mxu0 0
        %559 = vmatprep.subr.bf16.mxu0 0
        %560 = vmatpush1.bf16.msra.mxu0 0
        %561 = vmatprep.subr.bf16.mxu0 0
        %562 = vmatpush1.bf16.msra.mxu0 0
        %563 = vmatprep.mubr.bf16.mxu0 0
        %564 = vmatmul.mubr.bf16.gmra.mrb[0].mxu0 %v526
        %v565 = vpop.f32.mrb[0].mxu0
        %v566 = vadd.f32 %v497, %v565
        %v567 = vpop.f32.mrb[0].mxu0
        %v568 = vpop.f32.mrb[0].mxu0
        %v569 = vadd.f32 %v502, %v568
        %v570 = vpop.f32.mrb[0].mxu0
        %571 = vmatprep.mubr.bf16.mxu0 0
        %572 = vmatmul.mubr.bf16.gmra.mrb[0].mxu0 %v529
        %v573 = vpop.f32.mrb[0].mxu0
        %v574 = vadd.f32 %v507, %v573
        %v575 = vpop.f32.mrb[0].mxu0
        %v576 = vpop.f32.mrb[0].mxu0
        %v577 = vadd.f32 %v512, %v576
        %v578 = vpop.f32.mrb[0].mxu0
        %579 = vdwg.mxu0
        %v580 = vmax.f32 %v566, 0.0
        %v581 = vmax.f32 %v569, 0.0
        %v582 = vmax.f32 %v574, 0.0
        %v583 = vmax.f32 %v577, 0.0
        %v584 = vpack.c.bf16 %v581, %v580
        %v585 = vpack.c.bf16 %v583, %v582
        %v586 = vld [vmem:[%s5] sm:$0xf]
        %v587 = vld [vmem:[%s5 + $0x4] sm:$0xf]
        %v588 = vld [vmem:[%s5 + $0x8] sm:$0xf]
        %v589 = vld [vmem:[%s5 + $0xc] sm:$0xf]
        %v590 = vld [vmem:[%s6] sm:$0xff]
        %v591 = vld [vmem:[%s6 + $0x8] sm:$0xff]
        %v592 = vld [vmem:[%s6 + $0x10] sm:$0xff]
        %v593 = vld [vmem:[%s6 + $0x18] sm:$0xff]
        %595 = vset.pattern.permute.xlu0 0
        %596 = vperm.xlu0 %595, %v590
        %v597 = vpop.permute.xlu0 %596
        %600 = vset.pattern.permute.xlu0 0
        %601 = vperm.xlu0 %600, %v591
        %v602 = vpop.permute.xlu0 %601
        %605 = vset.pattern.permute.xlu0 0
        %606 = vperm.xlu0 %605, %v592
        %v607 = vpop.permute.xlu0 %606
        %610 = vset.pattern.permute.xlu0 0
        %611 = vperm.xlu0 %610, %v593
        %v612 = vpop.permute.xlu0 %611
        %v618 = vunpack.c.l.b16 %v586
        %v619 = vunpack.c.l.b16 %v587
        %v620 = vunpack.c.l.b16 %v588
        %v621 = vunpack.c.l.b16 %v589
        %v622 = vpack.c.b16 %v619, %v618
        %v623 = vpack.c.b16 %v621, %v620
        %v625 = vsel %vm524, %v622, 0
        %v628 = vsel %vm524, %v623, 0
        %630 = vmatprep.subr.bf16.mxu0 0
        %631 = vmatpush1.bf16.msra.mxu0 %v584
        %632 = vmatprep.subr.bf16.mxu0 0
        %633 = vmatpush1.bf16.msra.mxu0 %v585
        %634 = vmatprep.subr.bf16.mxu0 0
        %635 = vmatpush1.bf16.msra.mxu0 0
        %636 = vmatprep.subr.bf16.mxu0 0
        %637 = vmatpush1.bf16.msra.mxu0 0
        %638 = vmatprep.subr.bf16.mxu0 0
        %639 = vmatpush1.bf16.msra.mxu0 0
        %640 = vmatprep.subr.bf16.mxu0 0
        %641 = vmatpush1.bf16.msra.mxu0 0
        %642 = vmatprep.subr.bf16.mxu0 0
        %643 = vmatpush1.bf16.msra.mxu0 0
        %644 = vmatprep.subr.bf16.mxu0 0
        %645 = vmatpush1.bf16.msra.mxu0 0
        %646 = vmatprep.subr.bf16.mxu0 0
        %647 = vmatpush1.bf16.msra.mxu0 0
        %648 = vmatprep.subr.bf16.mxu0 0
        %649 = vmatpush1.bf16.msra.mxu0 0
        %650 = vmatprep.subr.bf16.mxu0 0
        %651 = vmatpush1.bf16.msra.mxu0 0
        %652 = vmatprep.subr.bf16.mxu0 0
        %653 = vmatpush1.bf16.msra.mxu0 0
        %654 = vmatprep.subr.bf16.mxu0 0
        %655 = vmatpush1.bf16.msra.mxu0 0
        %656 = vmatprep.subr.bf16.mxu0 0
        %657 = vmatpush1.bf16.msra.mxu0 0
        %658 = vmatprep.subr.bf16.mxu0 0
        %659 = vmatpush1.bf16.msra.mxu0 0
        %660 = vmatprep.subr.bf16.mxu0 0
        %661 = vmatpush1.bf16.msra.mxu0 0
        %662 = vmatprep.mubr.bf16.mxu0 0
        %663 = vmatmul.mubr.bf16.gmra.mrb[0].mxu0 %v625
        %v664 = vpop.f32.mrb[0].mxu0
        %v665 = vadd.f32 %v597, %v664
        %v666 = vpop.f32.mrb[0].mxu0
        %v667 = vpop.f32.mrb[0].mxu0
        %v668 = vadd.f32 %v602, %v667
        %v669 = vpop.f32.mrb[0].mxu0
        %670 = vmatprep.mubr.bf16.mxu0 0
        %671 = vmatmul.mubr.bf16.gmra.mrb[0].mxu0 %v628
        %v672 = vpop.f32.mrb[0].mxu0
        %v673 = vadd.f32 %v607, %v672
        %v674 = vpop.f32.mrb[0].mxu0
        %v675 = vpop.f32.mrb[0].mxu0
        %v676 = vadd.f32 %v612, %v675
        %v677 = vpop.f32.mrb[0].mxu0
        %678 = vdwg.mxu0
        %v679 = vmax.f32 %v665, 0.0
        %v680 = vmax.f32 %v668, 0.0
        %v681 = vmax.f32 %v673, 0.0
        %v682 = vmax.f32 %v676, 0.0
        %v683 = vpack.c.bf16 %v680, %v679
        %v684 = vpack.c.bf16 %v682, %v681
        %v685 = vld [vmem:[%s7] sm:$0x1]
        %v686 = vld [vmem:[#allocation2] sm:$0x1]
        %688 = vset.pattern.permute.xlu0 0
        %689 = vperm.xlu0 %688, %v686
        %v690 = vpop.permute.xlu0 %689
        %v692 = vlaneseq
        %v693 = vshrl.u32 %v692, 7
        %v694 = vsub.s32 0, %v693
        %v695 = vrot.slane %v690, %v694
        %v697 = vsel %vm524, %v685, 0
        %699 = vmatprep.subr.bf16.mxu0 0
        %700 = vmatpush1.bf16.msra.mxu0 %v683
        %701 = vmatprep.subr.bf16.mxu0 0
        %702 = vmatpush1.bf16.msra.mxu0 %v684
        %703 = vmatprep.subr.bf16.mxu0 0
        %704 = vmatpush1.bf16.msra.mxu0 0
        %705 = vmatprep.subr.bf16.mxu0 0
        %706 = vmatpush1.bf16.msra.mxu0 0
        %707 = vmatprep.subr.bf16.mxu0 0
        %708 = vmatpush1.bf16.msra.mxu0 0
        %709 = vmatprep.subr.bf16.mxu0 0
        %710 = vmatpush1.bf16.msra.mxu0 0
        %711 = vmatprep.subr.bf16.mxu0 0
        %712 = vmatpush1.bf16.msra.mxu0 0
        %713 = vmatprep.subr.bf16.mxu0 0
        %714 = vmatpush1.bf16.msra.mxu0 0
        %715 = vmatprep.subr.bf16.mxu0 0
        %716 = vmatpush1.bf16.msra.mxu0 0
        %717 = vmatprep.subr.bf16.mxu0 0
        %718 = vmatpush1.bf16.msra.mxu0 0
        %719 = vmatprep.subr.bf16.mxu0 0
        %720 = vmatpush1.bf16.msra.mxu0 0
        %721 = vmatprep.subr.bf16.mxu0 0
        %722 = vmatpush1.bf16.msra.mxu0 0
        %723 = vmatprep.subr.bf16.mxu0 0
        %724 = vmatpush1.bf16.msra.mxu0 0
        %725 = vmatprep.subr.bf16.mxu0 0
        %726 = vmatpush1.bf16.msra.mxu0 0
        %727 = vmatprep.subr.bf16.mxu0 0
        %728 = vmatpush1.bf16.msra.mxu0 0
        %729 = vmatprep.subr.bf16.mxu0 0
        %730 = vmatpush1.bf16.msra.mxu0 0
        %731 = vmatprep.mubr.bf16.mxu0 0
        %732 = vmatmul.mubr.bf16.gmra.mrb[0].mxu0 %v697
        %v733 = vpop.f32.mrb[0].mxu0
        %v734 = vadd.f32 %v695, %v733
        %v735 = vpop.f32.mrb[0].mxu0
        %v736 = vpop.f32.mrb[0].mxu0
        %v737 = vpop.f32.mrb[0].mxu0
        %738 = vdwg.mxu0
        %739 = vst [vmem:[%s376] sm:$0x1] %v734
        %s740 = sand.u32 %s227, 1
        %s741 = scalar_lea.sflag [#allocation5], %s740
        %s742 = sand.u32 %s227, 1
        %s743 = scalar_lea.vmem [#allocation4], %s742
        // Predicated region
        $region98: #{tpu_custom_call.1} parent=92 // pred_check
          %p744 = pneg %p237
        $region99: #{tpu_custom_call.1} parent=92 // pred_check_branch
          %746 = sbr.rel (%p744) target = $region101
        $region100: #{tpu_custom_call.1} parent=92 // pred_region
          %s748 = ssub.s32 16, 16
          %749 = vsyncadd %s741, %s748
          %s750 = smul.addr %s25, 16
          %s751 = scalar_lea.hbm %s9, %s750
          %s753 = sshll.u32 %s743, 4
          %s754 = int_to_ptr.vmem [resolvable:$true] %s753
          %756 = dma.vmem_to_hbm [thread:$0]  %s754, 16, %s751, %s741
        $region101: #{tpu_custom_call.1} parent=92 // pred_fallthru
          _
      $region93: #{tpu_custom_call.1} parent=5 // pred_fallthru
        _
      %p757 = scmp.le.s32.totalorder 2, %s20
      // Predicated region
      $region102: #{tpu_custom_call.1} parent=5 // pred_check
        %p758 = pneg %p757
      $region103: #{tpu_custom_call.1} parent=5 // pred_check_branch
        %760 = sbr.rel (%p758) target = $region105
      $region104: #{tpu_custom_call.1} parent=5 // pred_region
        %s761 = ssub.s32 %s20, 2
        // Predicated region
        $region106: #{tpu_custom_call.1} parent=104 // pred_check
          %p762 = pneg %p243
        $region107: #{tpu_custom_call.1} parent=104 // pred_check_branch
          %764 = sbr.rel (%p762) target = $region109
        $region108: #{tpu_custom_call.1} parent=104 // pred_region
          %s765 = sand.u32 %s228, 1
          %s766 = scalar_lea.sflag [#allocation5], %s765
          %s767 = sand.u32 %s228, 1
          %s768 = scalar_lea.vmem [#allocation4], %s767
          %769 = dma.done %s766, 16
        $region109: #{tpu_custom_call.1} parent=104 // pred_fallthru
          _
      $region105: #{tpu_custom_call.1} parent=5 // pred_fallthru
        _
    $region6: #{tpu_custom_call.1} parent=1 // loop_footer
      %s24 = sadd.s32 1, %s20
    $region7: #{tpu_custom_call.1} parent=1 // loop_footer_branch
      %19 = sbr.rel target = $region3
    $region8: #{tpu_custom_call.1} parent=1 // loop_exit
      _
    %770 = vsyncpa [#allocation5], 1
    %s771 = scalar_lea.sflag [#allocation5], 1
    %772 = vsyncpa %s771, 1

</llo_original>
